<compile_context>
chip_gen: v5e
topology: v5e:2x2
jax: 0.10.0
libtpu: 0.0.40
codegen_flags: <defaults>
</compile_context>

<pallas_src>
import functools
import math

import jax
import jax.numpy as jnp
from jax.experimental import pallas as pl
from jax.experimental.pallas import tpu as pltpu

LANE = 128

# Tile caps: double-buffered worst-case tiles stay well under the 32 MiB
# scoped-VMEM default of v7x (64 MiB physical) and trivially fit v5e/v6e.
_TM_CAP = 512
_TN_CAP = 512
_TK_CAP_MXU = 1024
_TK_CAP_ROWDOT = 2048


# ---------------------------------------------------------------------------
# Planning helpers
# ---------------------------------------------------------------------------
def _sublane(dtype):
    return 16 if jnp.dtype(dtype) == jnp.dtype(jnp.bfloat16) else 8


def _plan_axis(dim, cap, align):
    """Pick (tile, padded_dim) for one axis.

    If the axis fits under `cap`, use a single full-extent block: no padding at
    all (Mosaic pads internally in VMEM, no HBM traffic).  Otherwise pick a
    tile that is a multiple of `align`, keeping padding waste under ~12.5%,
    then minimizing grid steps, preferring 256-multiples (v6e/v7x MXU width)
    and larger tiles.
    """
    dim = int(dim)
    if dim <= cap:
        return dim, dim
    best_score, best_t = None, align
    for t in range(cap, align - 1, -align):
        pad = (-dim) % t
        padded = dim + pad
        score = (int(8 * pad / padded),      # waste in 12.5% buckets
                 padded // t,                # grid steps
                 0 if t % 256 == 0 else 1,   # prefer 256-multiples
                 -t)                         # prefer larger tiles
        if best_score is None or score < best_score:
            best_score, best_t = score, t
    return best_t, dim + (-dim) % best_t


def _vmem_limit(entries):
    """Scoped-VMEM request derived from the actual tiles (+25% headroom)."""
    total = 0
    for shape, dtype, nbuf in entries:
        total += nbuf * math.prod(shape) * jnp.dtype(dtype).itemsize
    total = int(total * 1.25) + (1 << 20)
    # Floor 8 MiB; cap 40 MiB so the same config cannot over-provision v7x
    # (64 MiB physical VMEM per TC) while remaining trivially safe on v5e/v6e.
    return max(8 << 20, min(total, 40 << 20))


# ---------------------------------------------------------------------------
# Kernels
# ---------------------------------------------------------------------------
def _matmul_single_k_kernel(x_ref, w_ref, b_ref, o_ref):
    """y = x @ Wt + b, whole reduction in one block (no scratch, no phases)."""
    o_ref[...] = (jnp.dot(x_ref[...], w_ref[...],
                          preferred_element_type=jnp.float32)
                  + b_ref[...]).astype(o_ref.dtype)


def _matmul_multi_k_kernel(x_ref, w_ref, b_ref, o_ref, acc_ref):
    """K-tiled y = x @ Wt + b with a resident f32 accumulator."""
    k = pl.program_id(2)

    @pl.when(k == 0)
    def _():
        acc_ref[...] = jnp.zeros_like(acc_ref)

    acc_ref[...] += jnp.dot(x_ref[...], w_ref[...],
                            preferred_element_type=jnp.float32)

    @pl.when(k == pl.num_programs(2) - 1)
    def _():
        o_ref[...] = (acc_ref[...] + b_ref[...]).astype(o_ref.dtype)


def _rowdot_block_kernel(x_ref, w_ref, b_ref, o_ref):
    """dim_out == 1, reduction fits in one block: y = sum(x*w, -1) + b."""
    prod = x_ref[...].astype(jnp.float32) * w_ref[...].astype(jnp.float32)
    y = jnp.sum(prod, axis=-1, keepdims=True) + b_ref[0]
    o_ref[...] = y.astype(o_ref.dtype)


def _rowdot_multi_k_kernel(x_ref, w_ref, b_ref, o_ref, acc_ref, *, n_chunks):
    """dim_out == 1, K-tiled.  Accumulate lane-wise partial sums in a
    (TM, 128) f32 scratch (pure VPU adds per step); the single cross-lane
    reduction happens only in the k == last epilogue."""
    k = pl.program_id(1)

    @pl.when(k == 0)
    def _():
        acc_ref[...] = jnp.zeros_like(acc_ref)

    prod = x_ref[...].astype(jnp.float32) * w_ref[...].astype(jnp.float32)
    acc = acc_ref[...]
    for c in range(n_chunks):                      # static, lane-aligned slices
        acc = acc + prod[:, c * LANE:(c + 1) * LANE]
    acc_ref[...] = acc

    @pl.when(k == pl.num_programs(1) - 1)
    def _():
        o_ref[...] = (jnp.sum(acc_ref[...], axis=-1, keepdims=True)
                      + b_ref[0]).astype(o_ref.dtype)


# ---------------------------------------------------------------------------
# One-time parameter preparation (hoisted out of the per-call forward)
# ---------------------------------------------------------------------------
def prepare_prednet_params(weight, bias, *, compute_dtype=jnp.float32):
    """Cast / transpose / pad the Linear parameters once; reuse every forward.

    weight: (dim_out, dim_inp)  (torch.nn.Linear layout)
    bias:   (dim_out,)
    compute_dtype: operand dtype fed to the MXU/VPU (f32 default = bit parity
                   with torch; bf16 is an explicit opt-in, f32 accumulate).
    """
    assert weight.ndim == 2, weight.shape
    dim_out, dim_inp = int(weight.shape[0]), int(weight.shape[1])
    p = {"dim_inp": dim_inp, "dim_out": dim_out,
         "compute_dtype": jnp.dtype(compute_dtype)}

    if dim_out == 1:
        TK, K_pad = _plan_axis(dim_inp, _TK_CAP_ROWDOT, LANE)
        w_row = weight.reshape(1, dim_inp).astype(compute_dtype)
        if K_pad > dim_inp:
            w_row = jnp.pad(w_row, ((0, 0), (0, K_pad - dim_inp)))
        p.update(kind="rowdot", w=w_row,
                 b=bias.reshape(1).astype(jnp.float32),   # SMEM scalar
                 TK=TK, K_pad=K_pad)
    else:
        TK, K_pad = _plan_axis(dim_inp, _TK_CAP_MXU, LANE)
        TN, N_pad = _plan_axis(dim_out, _TN_CAP, LANE)
        # One-time transpose to (K, N): kernel contracts x's lane axis with the
        # weight's sublane axis -- the native MXU orientation.
        wt = weight.T.astype(compute_dtype)
        if K_pad > dim_inp or N_pad > dim_out:
            wt = jnp.pad(wt, ((0, K_pad - dim_inp), (0, N_pad - dim_out)))
        b2 = bias.reshape(1, dim_out).astype(jnp.float32)
        if N_pad > dim_out:
            b2 = jnp.pad(b2, ((0, 0), (0, N_pad - dim_out)))
        p.update(kind="matmul", w=wt, b=b2,
                 TK=TK, K_pad=K_pad, TN=TN, N_pad=N_pad)

    p["w"] = jax.block_until_ready(p["w"])
    p["b"] = jax.block_until_ready(p["b"])
    return p


# ---------------------------------------------------------------------------
# Forward
# ---------------------------------------------------------------------------
def _forward_rowdot(xc, p, B, sub, out_dtype):
    dim_inp, K_pad, TK = p["dim_inp"], p["K_pad"], p["TK"]
    w, b = p["w"], p["b"]
    gk = K_pad // TK

    TM, M_pad = _plan_axis(B, _TM_CAP, sub)
    gm = M_pad // TM

    pad_m, pad_k = M_pad - B, K_pad - dim_inp
    if pad_m or pad_k:
        xc = jnp.pad(xc, ((0, pad_m), (0, pad_k)))

    smem_spec = pl.BlockSpec(memory_space=pltpu.MemorySpace.SMEM)

    if gk == 1 and gm == 1:
        # Tiny default PredNet head: single block, no grid, no scratch,
        # no padding -- pure-latency path.
        out = pl.pallas_call(
            _rowdot_block_kernel,
            out_shape=jax.ShapeDtypeStruct((M_pad, 1), out_dtype),
            in_specs=[pl.BlockSpec(memory_space=pltpu.MemorySpace.VMEM),
                      pl.BlockSpec(memory_space=pltpu.MemorySpace.VMEM),
                      smem_spec],
            out_specs=pl.BlockSpec(memory_space=pltpu.MemorySpace.VMEM),
            compiler_params=pltpu.CompilerParams(
                vmem_limit_bytes=_vmem_limit(
                    [((M_pad, K_pad), xc.dtype, 1),
                     ((1, K_pad), w.dtype, 1),
                     ((M_pad, 1), out_dtype, 1)])),
        )(xc, w, b)
    elif gk == 1:
        out = pl.pallas_call(
            _rowdot_block_kernel,
            out_shape=jax.ShapeDtypeStruct((M_pad, 1), out_dtype),
            grid=(gm,),
            in_specs=[pl.BlockSpec((TM, K_pad), lambda i: (i, 0)),
                      pl.BlockSpec((1, K_pad), lambda i: (0, 0)),
                      smem_spec],
            out_specs=pl.BlockSpec((TM, 1), lambda i: (i, 0)),
            compiler_params=pltpu.CompilerParams(
                dimension_semantics=("parallel",),
                vmem_limit_bytes=_vmem_limit(
                    [((TM, K_pad), xc.dtype, 2),
                     ((1, K_pad), w.dtype, 2),
                     ((TM, 1), out_dtype, 2)])),
        )(xc, w, b)
    else:
        kern = functools.partial(_rowdot_multi_k_kernel, n_chunks=TK // LANE)
        out = pl.pallas_call(
            kern,
            out_shape=jax.ShapeDtypeStruct((M_pad, 1), out_dtype),
            grid=(gm, gk),
            in_specs=[pl.BlockSpec((TM, TK), lambda i, k: (i, k)),
                      pl.BlockSpec((1, TK), lambda i, k: (0, k)),
                      smem_spec],
            out_specs=pl.BlockSpec((TM, 1), lambda i, k: (i, 0)),
            scratch_shapes=[pltpu.VMEM((TM, LANE), jnp.float32)],
            compiler_params=pltpu.CompilerParams(
                dimension_semantics=("parallel", "arbitrary"),
                vmem_limit_bytes=_vmem_limit(
                    [((TM, TK), xc.dtype, 2),
                     ((1, TK), w.dtype, 2),
                     ((TM, LANE), jnp.float32, 1),
                     ((TM, 1), out_dtype, 2)])),
        )(xc, w, b)

    return out[:B] if pad_m else out


def _forward_matmul(xc, p, B, sub, out_dtype):
    dim_inp, dim_out = p["dim_inp"], p["dim_out"]
    K_pad, TK, N_pad, TN = p["K_pad"], p["TK"], p["N_pad"], p["TN"]
    w, b = p["w"], p["b"]
    gk, gn = K_pad // TK, N_pad // TN

    TM, M_pad = _plan_axis(B, _TM_CAP, sub)
    gm = M_pad // TM
    # v7x megacore: guarantee >=2 blocks on a "parallel" axis when the batch
    # allows a pad-free split (no-op on single-TC v5e/v6e).
    if gm == 1 and gn == 1 and B >= 2 * sub and B % (2 * sub) == 0:
        TM = B // 2
        gm = 2

    pad_m, pad_k = M_pad - B, K_pad - dim_inp
    if pad_m or pad_k:
        xc = jnp.pad(xc, ((0, pad_m), (0, pad_k)))

    base_vmem = [((TM, TK), xc.dtype, 2), ((TK, TN), w.dtype, 2),
                 ((1, TN), jnp.float32, 2), ((TM, TN), out_dtype, 2)]

    if gk == 1:
        out = pl.pallas_call(
            _matmul_single_k_kernel,
            out_shape=jax.ShapeDtypeStruct((M_pad, N_pad), out_dtype),
            grid=(gm, gn),
            in_specs=[pl.BlockSpec((TM, K_pad), lambda i, j: (i, 0)),
                      pl.BlockSpec((K_pad, TN), lambda i, j: (0, j)),
                      pl.BlockSpec((1, TN), lambda i, j: (0, j))],
            out_specs=pl.BlockSpec((TM, TN), lambda i, j: (i, j)),
            compiler_params=pltpu.CompilerParams(
                dimension_semantics=("parallel", "parallel"),
                vmem_limit_bytes=_vmem_limit(base_vmem)),
        )(xc, w, b)
    else:
        out = pl.pallas_call(
            _matmul_multi_k_kernel,
            out_shape=jax.ShapeDtypeStruct((M_pad, N_pad), out_dtype),
            grid=(gm, gn, gk),
            in_specs=[pl.BlockSpec((TM, TK), lambda i, j, k: (i, k)),
                      pl.BlockSpec((TK, TN), lambda i, j, k: (k, j)),
                      pl.BlockSpec((1, TN), lambda i, j, k: (0, j))],
            out_specs=pl.BlockSpec((TM, TN), lambda i, j, k: (i, j)),
            scratch_shapes=[pltpu.VMEM((TM, TN), jnp.float32)],
            compiler_params=pltpu.CompilerParams(
                dimension_semantics=("parallel", "parallel", "arbitrary"),
                vmem_limit_bytes=_vmem_limit(
                    base_vmem + [((TM, TN), jnp.float32, 1)])),
        )(xc, w, b)

    if pad_m or N_pad > dim_out:
        out = out[:B, :dim_out]
    return out


def prednet_forward(x, params, *, out_dtype=jnp.float32):
    """PredNet.forward for the valid (<=2D) input path.

    x:      any shape that flattens to (-1, dim_inp) (torch: x.view(-1, dim_inp))
    params: output of prepare_prednet_params (weight prep is NOT redone here).
    """
    if x.ndim > 2:
        # TODO(synk): PyTorch >2D branch (AvgPool2d(2*H) on an HxW map) always
        # raises; there is no valid semantics to translate.
        raise ValueError("PredNet >2D branch has no valid PyTorch semantics.")

    dim_inp = params["dim_inp"]
    compute_dtype = params["compute_dtype"]
    x2d = x.reshape(-1, dim_inp)
    B = int(x2d.shape[0])
    sub = _sublane(compute_dtype)

    xc = x2d if x2d.dtype == compute_dtype else x2d.astype(compute_dtype)

    if params["kind"] == "rowdot":
        return _forward_rowdot(xc, params, B, sub, out_dtype)
    return _forward_matmul(xc, params, B, sub, out_dtype)


def init_prednet_params(key, dim_inp, dim_out):
    """Matches torch.nn.Linear default init: U(-1/sqrt(fan_in), 1/sqrt(fan_in))."""
    kw, kb = jax.random.split(key)
    bound = 1.0 / math.sqrt(dim_inp)
    weight = jax.random.uniform(kw, (dim_out, dim_inp), jnp.float32,
                                minval=-bound, maxval=bound)
    bias = jax.random.uniform(kb, (dim_out,), jnp.float32,
                              minval=-bound, maxval=bound)
    return weight, bias


# ---------------------------------------------------------------------------
# Self-test
# ---------------------------------------------------------------------------
if __name__ == "__main__":
    key = jax.random.PRNGKey(0)

    def linear_ref(x2d, w, b):
        return (jnp.dot(x2d, w.T, precision=jax.lax.Precision.HIGHEST)
                + b.reshape(1, -1))

    def check(name, y, y_ref, atol, rtol):
        err = jnp.max(jnp.abs(y - y_ref))
        assert y.shape == y_ref.shape, (name, y.shape, y_ref.shape)
        assert jnp.allclose(y, y_ref, atol=atol, rtol=rtol), f"{name}: max err {err}"

    # Case 1: PredNet defaults (dim_out=1, tiny) -> no-grid row-dot path.
    k1, k2, key = jax.random.split(key, 3)
    x = jax.random.normal(k1, (8, 32), jnp.float32)
    w, b = init_prednet_params(k2, 32, 1)
    params1 = prepare_prednet_params(w, b)
    y = jax.block_until_ready(prednet_forward(x, params1))
    check("case1 rowdot tiny", y, linear_ref(x, w, b), 1e-5, 1e-5)

    # Case 1b: view(-1, dim_inp) flattening semantics, (4, 64) -> (8, 32).
    k1, key = jax.random.split(key)
    x = jax.random.normal(k1, (4, 64), jnp.float32)
    y = jax.block_until_ready(prednet_forward(x, params1))
    check("case1b flatten", y, linear_ref(x.reshape(-1, 32), w, b), 1e-5, 1e-5)

    # Case 2: dim_out=1, large batch -> gridded row-dot over M (row padding).
    k1, k2, key = jax.random.split(key, 3)
    x = jax.random.normal(k1, (600, 64), jnp.float32)
    w, b = init_prednet_params(k2, 64, 1)
    y = jax.block_until_ready(prednet_forward(x, prepare_prednet_params(w, b)))
    check("case2 rowdot grid-M", y, linear_ref(x, w, b), 1e-4, 1e-4)

    # Case 3: dim_out=1, dim_inp=4096 > 2048 -> K-tiled row-dot, lane-wise acc.
    k1, k2, key = jax.random.split(key, 3)
    x = jax.random.normal(k1, (8, 4096), jnp.float32)
    w, b = init_prednet_params(k2, 4096, 1)
    y = jax.block_until_ready(prednet_forward(x, prepare_prednet_params(w, b)))
    check("case3 rowdot grid-K", y, linear_ref(x, w, b), 2e-3, 2e-3)

    # Case 4: wider head -> single-K MXU path (f32 with megacore M-split; bf16).
    k1, k2, key = jax.random.split(key, 3)
    x = jax.random.normal(k1, (16, 256), jnp.float32)
    w, b = init_prednet_params(k2, 256, 128)
    y_ref = linear_ref(x, w, b)
    y = jax.block_until_ready(prednet_forward(x, prepare_prednet_params(w, b)))
    check("case4 matmul f32", y, y_ref, 1e-3, 1e-3)
    params_bf16 = prepare_prednet_params(w, b, compute_dtype=jnp.bfloat16)
    y = jax.block_until_ready(prednet_forward(x, params_bf16))
    check("case4 matmul bf16", y, y_ref, 5e-2, 5e-2)

    # Case 5: unaligned dims, zero padding anywhere (full-extent blocks).
    k1, k2, key = jax.random.split(key, 3)
    x = jax.random.normal(k1, (16, 200), jnp.float32)
    w, b = init_prednet_params(k2, 200, 40)
    y = jax.block_until_ready(prednet_forward(x, prepare_prednet_params(w, b)))
    check("case5 matmul unaligned", y, linear_ref(x, w, b), 1e-3, 1e-3)

    # Case 6: dim_inp=1536 > 1024 -> K-tiled MXU path with f32 accumulator.
    k1, k2, key = jax.random.split(key, 3)
    x = jax.random.normal(k1, (16, 1536), jnp.float32)
    w, b = init_prednet_params(k2, 1536, 128)
    y = jax.block_until_ready(prednet_forward(x, prepare_prednet_params(w, b)))
    check("case6 matmul grid-K", y, linear_ref(x, w, b), 2e-3, 2e-3)

    print("KERNEL_OK")
</pallas_src>

<mosaic_0001>
module attributes {stable_mosaic.version = 11 : i64} {
  func.func @_rowdot_block_kernel(%arg0: memref<8x32xf32, #tpu.memory_space<vmem>>, %arg1: memref<1x32xf32, #tpu.memory_space<vmem>>, %arg2: memref<1xf32, #tpu.memory_space<smem>>, %arg3: memref<8x1xf32, #tpu.memory_space<vmem>>) attributes {dimension_semantics = [], scalar_prefetch = 0 : i64, scratch_operands = 0 : i64, tpu.core_type = #tpu.core_type<tc>} {
    %c0 = arith.constant 0 : index
    %c0_0 = arith.constant 0 : index
    %0 = vector.load %arg0[%c0, %c0_0] : memref<8x32xf32, #tpu.memory_space<vmem>>, vector<8x32xf32>
    %c0_1 = arith.constant 0 : index
    %c0_2 = arith.constant 0 : index
    %1 = vector.load %arg1[%c0_1, %c0_2] : memref<1x32xf32, #tpu.memory_space<vmem>>, vector<1x32xf32>
    %2 = vector.broadcast %1 : vector<1x32xf32> to vector<8x32xf32>
    %3 = arith.mulf %0, %2 : vector<8x32xf32>
    %cst = arith.constant dense<0.000000e+00> : vector<8xf32>
    %4 = vector.multi_reduction <add>, %3, %cst [1] : vector<8x32xf32> to vector<8xf32>
    %5 = vector.shape_cast %4 : vector<8xf32> to vector<8x1xf32>
    %c0_3 = arith.constant 0 : index
    %6 = memref.load %arg2[%c0_3] : memref<1xf32, #tpu.memory_space<smem>>
    %7 = vector.broadcast %6 : f32 to vector<8x1xf32>
    %8 = arith.addf %5, %7 : vector<8x1xf32>
    %c0_4 = arith.constant 0 : index
    %c0_5 = arith.constant 0 : index
    %9 = vector.load %arg3[%c0_4, %c0_5] : memref<8x1xf32, #tpu.memory_space<vmem>>, vector<8x1xf32>
    tpu.vector_store %arg3[%c0_4, %c0_5], %8 {strides = array<i32>} : memref<8x1xf32, #tpu.memory_space<vmem>>, vector<8x1xf32>,
    return
  }
}

</mosaic_0001>

<llo_original>
// kernel: tpu_custom_call.1
$region0: #{tpu_custom_call.1}
  #allocation0 [shape = 'u32[]', space=smem, size = 0x4, offset = 0x4, fixed_abs, tag = 'smem constant byte address 0x4 - core index']
  #allocation1 [shape = 'u32[72,128]{1,0:T(1,128)}', space=vmem, size = 0x9000, scoped, tag = 'internal scratch']
  #allocation2 [shape = 'f32[1]{0:T(128)S(6)}', space=smem, size = 0x200, scoped, tag = 'scoped memory for tpu_custom_call.1']
  %s0 = inlined_call_operand.hbm [shape: f32[8,32], index: 0, kind: input, shape index: {}]
  %s1 = inlined_call_operand.vmem [shape: f32[1,32], index: 1, kind: input, shape index: {}]
  %s2 = inlined_call_operand.<no memory space> [shape: f32[1], index: 2, kind: input, shape index: {}]
  %s3 = inlined_call_operand.vmem [shape: f32[8,1], index: 3, kind: output, shape index: {}]
  %s4 = sld [smem:[#allocation0]]
  $region26: #{tpu_custom_call.1} parent=0
    _
  %s6 = ssub.s32 1, %s4
  %s7 = scalar_select 0, %s6, %s4
  %8 = sst [smem:[#allocation2]] %s2
  $region1: #{tpu_custom_call.1} parent=0
    #allocation3 [shape = 'u8[4096]{0}', space=vmem, size = 0x1000, scoped, tag = 'input window, operand 0, single buffered']
    #allocation4 [shape = 's32[1]{0}', space=sflag, size = 0x4, scoped, tag = 'scoped memory for tpu_custom_call.1']
    %9 = vsyncpa [#allocation4], 0
    // Predicated region
    $region2: #{tpu_custom_call.1} parent=1 // pred_check
      _
    $region3: #{tpu_custom_call.1} parent=1 // pred_check_branch
      %11 = sbr.rel (0) target = $region5
    $region4: #{tpu_custom_call.1} parent=1 // pred_region
      %13 = vsyncadd [#allocation4], 0
      %s15 = sshll.u32 %s0, 4
      %s16 = int_to_ptr.hbm [resolvable:$true] %s15
      %s17 = sshll.u32 [#allocation3], 4
      %s18 = int_to_ptr.vmem [resolvable:$true] %s17
      %20 = dma.hbm_to_vmem [thread:$0]  %s16, 128, %s18, [#allocation4]
    $region5: #{tpu_custom_call.1} parent=1 // pred_fallthru
      _
    // Predicated region
    $region6: #{tpu_custom_call.1} parent=1 // pred_check
      _
    $region7: #{tpu_custom_call.1} parent=1 // pred_check_branch
      %22 = sbr.rel (0) target = $region9
    $region8: #{tpu_custom_call.1} parent=1 // pred_region
      _
    $region9: #{tpu_custom_call.1} parent=1 // pred_fallthru
      _
    // Predicated region
    $region10: #{tpu_custom_call.1} parent=1 // pred_check
      _
    $region11: #{tpu_custom_call.1} parent=1 // pred_check_branch
      %24 = sbr.rel (0) target = $region13
    $region12: #{tpu_custom_call.1} parent=1 // pred_region
      _
    $region13: #{tpu_custom_call.1} parent=1 // pred_fallthru
      _
    // Predicated region
    $region14: #{tpu_custom_call.1} parent=1 // pred_check
      _
    $region15: #{tpu_custom_call.1} parent=1 // pred_check_branch
      %26 = sbr.rel (0) target = $region17
    $region16: #{tpu_custom_call.1} parent=1 // pred_region
      %28 = dma.done [#allocation4], 128
    $region17: #{tpu_custom_call.1} parent=1 // pred_fallthru
      _
    %v29 = vld [vmem:[#allocation3] sm:$0xff]
    %v30 = vld [vmem:[%s1] sm:$0x1]
    %v32 = vperm.slane %v30, 0
    %v34 = vmul.f32 %v29, %v32
    %vm35 = vcmask 261120
    %v36 = vsel %vm35, %v34, 0.0
    %37 = vadd.xlane.f32.xlu0 %v36
    %v38 = vpop.xlane.xlu0 %37
    %s39 = sld [smem:[#allocation2]]
    %v40 = vstv %s39
    %v41 = vadd.f32 %v38, %v40
    %vm42 = vcmask 7168
    %43 = vst.msk [vmem:[%s3] sm:$0xff] %vm42, %v41
    // Predicated region
    $region18: #{tpu_custom_call.1} parent=1 // pred_check
      _
    $region19: #{tpu_custom_call.1} parent=1 // pred_check_branch
      %45 = sbr.rel (0) target = $region21
    $region20: #{tpu_custom_call.1} parent=1 // pred_region
      _
    $region21: #{tpu_custom_call.1} parent=1 // pred_fallthru
      _
    // Predicated region
    $region22: #{tpu_custom_call.1} parent=1 // pred_check
      _
    $region23: #{tpu_custom_call.1} parent=1 // pred_check_branch
      %47 = sbr.rel (0) target = $region25
    $region24: #{tpu_custom_call.1} parent=1 // pred_region
      _
    $region25: #{tpu_custom_call.1} parent=1 // pred_fallthru
      _
    %48 = vsyncpa [#allocation4], 1

</llo_original>
